<compile_context>
chip_gen: v7x
topology: tpu7x:2x2x1
jax: 0.10.0
libtpu: 0.0.40
codegen_flags: <defaults>
</compile_context>

<pallas_src>
import jax
import jax.numpy as jnp
from jax.experimental import pallas as pl
from jax.experimental.pallas import tpu as pltpu

HIDDEN = 20
LANES = 128
N_ACC = 4  # independent partial accumulators in the unrolled loop


def mlp_kernel(w1_s, b1_s, w2_s, b2_s, x_ref, o_ref):
    """Lane-dense, VPU-only fused MLP.

    w1_s, b1_s, w2_s: SMEM refs (20,) f32 (scalar-prefetched weights)
    b2_s:             SMEM ref  (1,)  f32
    x_ref / o_ref:    (tile_rows, 128) f32 VMEM tiles of the flattened batch.
    """
    x = x_ref[...]                              # (tile_rows, 128) f32
    # N_ACC independent partial sums so the 20 chained adds don't serialize
    # (latency matters for small/single-vreg tiles; neutral for large tiles).
    accs = [None] * N_ACC
    # Static unroll over the 20 hidden units: ~5 VALU ops each, all scalar
    # broadcasts -- no MXU push/pop, no cross-lane XLU reduction.
    # (A further ~20% VALU cut -- statically folding w2's sign into a max/min
    #  per unit -- is inference-only/recompile-on-weight-change; not done here.)
    for j in range(HIDDEN):
        h = jnp.maximum(x * w1_s[j] + b1_s[j], 0.0)
        t = h * w2_s[j]
        k = j % N_ACC
        accs[k] = t if accs[k] is None else accs[k] + t
    acc = accs[0]
    for k in range(1, N_ACC):
        acc = acc + accs[k]
    o_ref[...] = acc + b2_s[0]                  # output-layer bias, added once


def net_forward(x, w1, b1, w2, b2, *, tile_rows=2048):
    """Forward pass of Net.

    x:  (N, 1) f32
    w1: (20,) f32  -- hidden.weight.squeeze(-1)
    b1: (20,) f32  -- hidden.bias
    w2: (20,) f32  -- predict.weight.squeeze(0)
    b2: (1,)  f32  -- predict.bias
    returns (N, 1) f32
    """
    n = x.shape[0]

    # Lane-dense slab: fold the batch onto 128 lanes; pad only to a multiple
    # of 8 rows (= 1024 elements), never to a multiple of the tile.
    rows = ((pl.cdiv(n, LANES) + 7) // 8) * 8
    padded = rows * LANES

    # Tile size: multiple of 8 sublanes, as large as useful (amortizes grid
    # step overhead), but capped so there are >=2 grid steps whenever rows
    # allow it (keeps v7x's second TensorCore busy via "parallel" semantics).
    # 2048x128 f32 = 1 MiB/buffer -> ~4 MiB with in+out double-buffering,
    # far below the 32 MiB scoped-VMEM default on every generation.
    tr = max(8, (min(tile_rows, rows) // 8) * 8)
    if rows >= 16:
        tr = min(tr, max(8, (rows // 2 // 8) * 8))
    grid = pl.cdiv(rows, tr)

    xf = x.reshape(-1)
    if padded != n:  # skip the extra HBM pass when N is already 1024-aligned
        xf = jnp.pad(xf, (0, padded - n))
    x2d = xf.reshape(rows, LANES)

    out2d = pl.pallas_call(
        mlp_kernel,
        out_shape=jax.ShapeDtypeStruct((rows, LANES), jnp.float32),
        grid_spec=pltpu.PrefetchScalarGridSpec(
            # 41 weight scalars live in SMEM for the whole grid:
            # no per-step weight DMA, no padded (8,128) weight tiles.
            num_scalar_prefetch=4,
            grid=(grid,),
            in_specs=[pl.BlockSpec((tr, LANES), lambda i, *_: (i, 0))],
            out_specs=pl.BlockSpec((tr, LANES), lambda i, *_: (i, 0)),
        ),
        compiler_params=pltpu.CompilerParams(
            # Embarrassingly parallel batch axis -> shard across v7x's 2 TCs.
            dimension_semantics=("parallel",),
        ),
    )(w1, b1, w2, b2, x2d)

    # Back to the module's (N, 1) output; avoid the slice-copy when unpadded.
    if padded == n:
        return out2d.reshape(n, 1)
    return out2d.reshape(-1)[:n].reshape(n, 1)


def init_params(key):
    """Deterministic init mimicking torch.nn.Linear's uniform default."""
    k1, k2, k3, k4 = jax.random.split(key, 4)
    bound1 = 1.0                               # hidden: fan_in = 1
    w1 = jax.random.uniform(k1, (HIDDEN,), jnp.float32, -bound1, bound1)
    b1 = jax.random.uniform(k2, (HIDDEN,), jnp.float32, -bound1, bound1)
    bound2 = 1.0 / jnp.sqrt(float(HIDDEN))     # predict: fan_in = 20
    w2 = jax.random.uniform(k3, (HIDDEN,), jnp.float32, -bound2, bound2)
    b2 = jax.random.uniform(k4, (1,), jnp.float32, -bound2, bound2)
    return w1, b1, w2, b2


if __name__ == "__main__":
    key = jax.random.PRNGKey(0)
    w1, b1, w2, b2 = init_params(key)

    # Same input as the original script: x = linspace(-1, 1, 1000)[:, None].
    n = 1000
    x = jnp.linspace(-1.0, 1.0, n, dtype=jnp.float32).reshape(n, 1)

    out = jax.block_until_ready(net_forward(x, w1, b1, w2, b2))

    # Plain-JAX reference.
    h = jnp.maximum(x * w1[None, :] + b1[None, :], 0.0)          # (N, 20)
    ref = h @ w2.reshape(HIDDEN, 1) + b2.reshape(1, 1)           # (N, 1)
    assert out.shape == (n, 1)
    assert jnp.allclose(out, ref, atol=1e-5, rtol=1e-5)

    print("KERNEL_OK")
</pallas_src>

<mosaic_0001>
module attributes {stable_mosaic.version = 11 : i64} {
  func.func @mlp_kernel(%arg0: i32, %arg1: memref<20xf32, #tpu.memory_space<smem>>, %arg2: memref<20xf32, #tpu.memory_space<smem>>, %arg3: memref<20xf32, #tpu.memory_space<smem>>, %arg4: memref<1xf32, #tpu.memory_space<smem>>, %arg5: memref<8x128xf32, #tpu.memory_space<vmem>>, %arg6: memref<8x128xf32, #tpu.memory_space<vmem>>) attributes {dimension_semantics = [#tpu.dimension_semantics<parallel>], iteration_bounds = array<i64: 1>, scalar_prefetch = 4 : i64, scratch_operands = 0 : i64, tpu.core_type = #tpu.core_type<tc>, window_params = [{transform_indices = @transform_0, window_bounds = array<i64: 8, 128>}, {transform_indices = @transform_1, window_bounds = array<i64: 8, 128>}]} {
    %c0 = arith.constant 0 : index
    %c0_0 = arith.constant 0 : index
    %0 = vector.load %arg5[%c0, %c0_0] : memref<8x128xf32, #tpu.memory_space<vmem>>, vector<8x128xf32>
    %c0_1 = arith.constant 0 : index
    %1 = memref.load %arg1[%c0_1] : memref<20xf32, #tpu.memory_space<smem>>
    %2 = vector.broadcast %1 : f32 to vector<8x128xf32>
    %3 = arith.mulf %0, %2 : vector<8x128xf32>
    %c0_2 = arith.constant 0 : index
    %4 = memref.load %arg2[%c0_2] : memref<20xf32, #tpu.memory_space<smem>>
    %5 = vector.broadcast %4 : f32 to vector<8x128xf32>
    %6 = arith.addf %3, %5 : vector<8x128xf32>
    %cst = arith.constant 0.000000e+00 : f32
    %7 = vector.broadcast %cst : f32 to vector<8x128xf32>
    %8 = arith.maximumf %6, %7 : vector<8x128xf32>
    %c0_3 = arith.constant 0 : index
    %9 = memref.load %arg3[%c0_3] : memref<20xf32, #tpu.memory_space<smem>>
    %10 = vector.broadcast %9 : f32 to vector<8x128xf32>
    %11 = arith.mulf %8, %10 : vector<8x128xf32>
    %c1 = arith.constant 1 : index
    %12 = memref.load %arg1[%c1] : memref<20xf32, #tpu.memory_space<smem>>
    %13 = vector.broadcast %12 : f32 to vector<8x128xf32>
    %14 = arith.mulf %0, %13 : vector<8x128xf32>
    %c1_4 = arith.constant 1 : index
    %15 = memref.load %arg2[%c1_4] : memref<20xf32, #tpu.memory_space<smem>>
    %16 = vector.broadcast %15 : f32 to vector<8x128xf32>
    %17 = arith.addf %14, %16 : vector<8x128xf32>
    %cst_5 = arith.constant 0.000000e+00 : f32
    %18 = vector.broadcast %cst_5 : f32 to vector<8x128xf32>
    %19 = arith.maximumf %17, %18 : vector<8x128xf32>
    %c1_6 = arith.constant 1 : index
    %20 = memref.load %arg3[%c1_6] : memref<20xf32, #tpu.memory_space<smem>>
    %21 = vector.broadcast %20 : f32 to vector<8x128xf32>
    %22 = arith.mulf %19, %21 : vector<8x128xf32>
    %c2 = arith.constant 2 : index
    %23 = memref.load %arg1[%c2] : memref<20xf32, #tpu.memory_space<smem>>
    %24 = vector.broadcast %23 : f32 to vector<8x128xf32>
    %25 = arith.mulf %0, %24 : vector<8x128xf32>
    %c2_7 = arith.constant 2 : index
    %26 = memref.load %arg2[%c2_7] : memref<20xf32, #tpu.memory_space<smem>>
    %27 = vector.broadcast %26 : f32 to vector<8x128xf32>
    %28 = arith.addf %25, %27 : vector<8x128xf32>
    %cst_8 = arith.constant 0.000000e+00 : f32
    %29 = vector.broadcast %cst_8 : f32 to vector<8x128xf32>
    %30 = arith.maximumf %28, %29 : vector<8x128xf32>
    %c2_9 = arith.constant 2 : index
    %31 = memref.load %arg3[%c2_9] : memref<20xf32, #tpu.memory_space<smem>>
    %32 = vector.broadcast %31 : f32 to vector<8x128xf32>
    %33 = arith.mulf %30, %32 : vector<8x128xf32>
    %c3 = arith.constant 3 : index
    %34 = memref.load %arg1[%c3] : memref<20xf32, #tpu.memory_space<smem>>
    %35 = vector.broadcast %34 : f32 to vector<8x128xf32>
    %36 = arith.mulf %0, %35 : vector<8x128xf32>
    %c3_10 = arith.constant 3 : index
    %37 = memref.load %arg2[%c3_10] : memref<20xf32, #tpu.memory_space<smem>>
    %38 = vector.broadcast %37 : f32 to vector<8x128xf32>
    %39 = arith.addf %36, %38 : vector<8x128xf32>
    %cst_11 = arith.constant 0.000000e+00 : f32
    %40 = vector.broadcast %cst_11 : f32 to vector<8x128xf32>
    %41 = arith.maximumf %39, %40 : vector<8x128xf32>
    %c3_12 = arith.constant 3 : index
    %42 = memref.load %arg3[%c3_12] : memref<20xf32, #tpu.memory_space<smem>>
    %43 = vector.broadcast %42 : f32 to vector<8x128xf32>
    %44 = arith.mulf %41, %43 : vector<8x128xf32>
    %c4 = arith.constant 4 : index
    %45 = memref.load %arg1[%c4] : memref<20xf32, #tpu.memory_space<smem>>
    %46 = vector.broadcast %45 : f32 to vector<8x128xf32>
    %47 = arith.mulf %0, %46 : vector<8x128xf32>
    %c4_13 = arith.constant 4 : index
    %48 = memref.load %arg2[%c4_13] : memref<20xf32, #tpu.memory_space<smem>>
    %49 = vector.broadcast %48 : f32 to vector<8x128xf32>
    %50 = arith.addf %47, %49 : vector<8x128xf32>
    %cst_14 = arith.constant 0.000000e+00 : f32
    %51 = vector.broadcast %cst_14 : f32 to vector<8x128xf32>
    %52 = arith.maximumf %50, %51 : vector<8x128xf32>
    %c4_15 = arith.constant 4 : index
    %53 = memref.load %arg3[%c4_15] : memref<20xf32, #tpu.memory_space<smem>>
    %54 = vector.broadcast %53 : f32 to vector<8x128xf32>
    %55 = arith.mulf %52, %54 : vector<8x128xf32>
    %56 = arith.addf %11, %55 : vector<8x128xf32>
    %c5 = arith.constant 5 : index
    %57 = memref.load %arg1[%c5] : memref<20xf32, #tpu.memory_space<smem>>
    %58 = vector.broadcast %57 : f32 to vector<8x128xf32>
    %59 = arith.mulf %0, %58 : vector<8x128xf32>
    %c5_16 = arith.constant 5 : index
    %60 = memref.load %arg2[%c5_16] : memref<20xf32, #tpu.memory_space<smem>>
    %61 = vector.broadcast %60 : f32 to vector<8x128xf32>
    %62 = arith.addf %59, %61 : vector<8x128xf32>
    %cst_17 = arith.constant 0.000000e+00 : f32
    %63 = vector.broadcast %cst_17 : f32 to vector<8x128xf32>
    %64 = arith.maximumf %62, %63 : vector<8x128xf32>
    %c5_18 = arith.constant 5 : index
    %65 = memref.load %arg3[%c5_18] : memref<20xf32, #tpu.memory_space<smem>>
    %66 = vector.broadcast %65 : f32 to vector<8x128xf32>
    %67 = arith.mulf %64, %66 : vector<8x128xf32>
    %68 = arith.addf %22, %67 : vector<8x128xf32>
    %c6 = arith.constant 6 : index
    %69 = memref.load %arg1[%c6] : memref<20xf32, #tpu.memory_space<smem>>
    %70 = vector.broadcast %69 : f32 to vector<8x128xf32>
    %71 = arith.mulf %0, %70 : vector<8x128xf32>
    %c6_19 = arith.constant 6 : index
    %72 = memref.load %arg2[%c6_19] : memref<20xf32, #tpu.memory_space<smem>>
    %73 = vector.broadcast %72 : f32 to vector<8x128xf32>
    %74 = arith.addf %71, %73 : vector<8x128xf32>
    %cst_20 = arith.constant 0.000000e+00 : f32
    %75 = vector.broadcast %cst_20 : f32 to vector<8x128xf32>
    %76 = arith.maximumf %74, %75 : vector<8x128xf32>
    %c6_21 = arith.constant 6 : index
    %77 = memref.load %arg3[%c6_21] : memref<20xf32, #tpu.memory_space<smem>>
    %78 = vector.broadcast %77 : f32 to vector<8x128xf32>
    %79 = arith.mulf %76, %78 : vector<8x128xf32>
    %80 = arith.addf %33, %79 : vector<8x128xf32>
    %c7 = arith.constant 7 : index
    %81 = memref.load %arg1[%c7] : memref<20xf32, #tpu.memory_space<smem>>
    %82 = vector.broadcast %81 : f32 to vector<8x128xf32>
    %83 = arith.mulf %0, %82 : vector<8x128xf32>
    %c7_22 = arith.constant 7 : index
    %84 = memref.load %arg2[%c7_22] : memref<20xf32, #tpu.memory_space<smem>>
    %85 = vector.broadcast %84 : f32 to vector<8x128xf32>
    %86 = arith.addf %83, %85 : vector<8x128xf32>
    %cst_23 = arith.constant 0.000000e+00 : f32
    %87 = vector.broadcast %cst_23 : f32 to vector<8x128xf32>
    %88 = arith.maximumf %86, %87 : vector<8x128xf32>
    %c7_24 = arith.constant 7 : index
    %89 = memref.load %arg3[%c7_24] : memref<20xf32, #tpu.memory_space<smem>>
    %90 = vector.broadcast %89 : f32 to vector<8x128xf32>
    %91 = arith.mulf %88, %90 : vector<8x128xf32>
    %92 = arith.addf %44, %91 : vector<8x128xf32>
    %c8 = arith.constant 8 : index
    %93 = memref.load %arg1[%c8] : memref<20xf32, #tpu.memory_space<smem>>
    %94 = vector.broadcast %93 : f32 to vector<8x128xf32>
    %95 = arith.mulf %0, %94 : vector<8x128xf32>
    %c8_25 = arith.constant 8 : index
    %96 = memref.load %arg2[%c8_25] : memref<20xf32, #tpu.memory_space<smem>>
    %97 = vector.broadcast %96 : f32 to vector<8x128xf32>
    %98 = arith.addf %95, %97 : vector<8x128xf32>
    %cst_26 = arith.constant 0.000000e+00 : f32
    %99 = vector.broadcast %cst_26 : f32 to vector<8x128xf32>
    %100 = arith.maximumf %98, %99 : vector<8x128xf32>
    %c8_27 = arith.constant 8 : index
    %101 = memref.load %arg3[%c8_27] : memref<20xf32, #tpu.memory_space<smem>>
    %102 = vector.broadcast %101 : f32 to vector<8x128xf32>
    %103 = arith.mulf %100, %102 : vector<8x128xf32>
    %104 = arith.addf %56, %103 : vector<8x128xf32>
    %c9 = arith.constant 9 : index
    %105 = memref.load %arg1[%c9] : memref<20xf32, #tpu.memory_space<smem>>
    %106 = vector.broadcast %105 : f32 to vector<8x128xf32>
    %107 = arith.mulf %0, %106 : vector<8x128xf32>
    %c9_28 = arith.constant 9 : index
    %108 = memref.load %arg2[%c9_28] : memref<20xf32, #tpu.memory_space<smem>>
    %109 = vector.broadcast %108 : f32 to vector<8x128xf32>
    %110 = arith.addf %107, %109 : vector<8x128xf32>
    %cst_29 = arith.constant 0.000000e+00 : f32
    %111 = vector.broadcast %cst_29 : f32 to vector<8x128xf32>
    %112 = arith.maximumf %110, %111 : vector<8x128xf32>
    %c9_30 = arith.constant 9 : index
    %113 = memref.load %arg3[%c9_30] : memref<20xf32, #tpu.memory_space<smem>>
    %114 = vector.broadcast %113 : f32 to vector<8x128xf32>
    %115 = arith.mulf %112, %114 : vector<8x128xf32>
    %116 = arith.addf %68, %115 : vector<8x128xf32>
    %c10 = arith.constant 10 : index
    %117 = memref.load %arg1[%c10] : memref<20xf32, #tpu.memory_space<smem>>
    %118 = vector.broadcast %117 : f32 to vector<8x128xf32>
    %119 = arith.mulf %0, %118 : vector<8x128xf32>
    %c10_31 = arith.constant 10 : index
    %120 = memref.load %arg2[%c10_31] : memref<20xf32, #tpu.memory_space<smem>>
    %121 = vector.broadcast %120 : f32 to vector<8x128xf32>
    %122 = arith.addf %119, %121 : vector<8x128xf32>
    %cst_32 = arith.constant 0.000000e+00 : f32
    %123 = vector.broadcast %cst_32 : f32 to vector<8x128xf32>
    %124 = arith.maximumf %122, %123 : vector<8x128xf32>
    %c10_33 = arith.constant 10 : index
    %125 = memref.load %arg3[%c10_33] : memref<20xf32, #tpu.memory_space<smem>>
    %126 = vector.broadcast %125 : f32 to vector<8x128xf32>
    %127 = arith.mulf %124, %126 : vector<8x128xf32>
    %128 = arith.addf %80, %127 : vector<8x128xf32>
    %c11 = arith.constant 11 : index
    %129 = memref.load %arg1[%c11] : memref<20xf32, #tpu.memory_space<smem>>
    %130 = vector.broadcast %129 : f32 to vector<8x128xf32>
    %131 = arith.mulf %0, %130 : vector<8x128xf32>
    %c11_34 = arith.constant 11 : index
    %132 = memref.load %arg2[%c11_34] : memref<20xf32, #tpu.memory_space<smem>>
    %133 = vector.broadcast %132 : f32 to vector<8x128xf32>
    %134 = arith.addf %131, %133 : vector<8x128xf32>
    %cst_35 = arith.constant 0.000000e+00 : f32
    %135 = vector.broadcast %cst_35 : f32 to vector<8x128xf32>
    %136 = arith.maximumf %134, %135 : vector<8x128xf32>
    %c11_36 = arith.constant 11 : index
    %137 = memref.load %arg3[%c11_36] : memref<20xf32, #tpu.memory_space<smem>>
    %138 = vector.broadcast %137 : f32 to vector<8x128xf32>
    %139 = arith.mulf %136, %138 : vector<8x128xf32>
    %140 = arith.addf %92, %139 : vector<8x128xf32>
    %c12 = arith.constant 12 : index
    %141 = memref.load %arg1[%c12] : memref<20xf32, #tpu.memory_space<smem>>
    %142 = vector.broadcast %141 : f32 to vector<8x128xf32>
    %143 = arith.mulf %0, %142 : vector<8x128xf32>
    %c12_37 = arith.constant 12 : index
    %144 = memref.load %arg2[%c12_37] : memref<20xf32, #tpu.memory_space<smem>>
    %145 = vector.broadcast %144 : f32 to vector<8x128xf32>
    %146 = arith.addf %143, %145 : vector<8x128xf32>
    %cst_38 = arith.constant 0.000000e+00 : f32
    %147 = vector.broadcast %cst_38 : f32 to vector<8x128xf32>
    %148 = arith.maximumf %146, %147 : vector<8x128xf32>
    %c12_39 = arith.constant 12 : index
    %149 = memref.load %arg3[%c12_39] : memref<20xf32, #tpu.memory_space<smem>>
    %150 = vector.broadcast %149 : f32 to vector<8x128xf32>
    %151 = arith.mulf %148, %150 : vector<8x128xf32>
    %152 = arith.addf %104, %151 : vector<8x128xf32>
    %c13 = arith.constant 13 : index
    %153 = memref.load %arg1[%c13] : memref<20xf32, #tpu.memory_space<smem>>
    %154 = vector.broadcast %153 : f32 to vector<8x128xf32>
    %155 = arith.mulf %0, %154 : vector<8x128xf32>
    %c13_40 = arith.constant 13 : index
    %156 = memref.load %arg2[%c13_40] : memref<20xf32, #tpu.memory_space<smem>>
    %157 = vector.broadcast %156 : f32 to vector<8x128xf32>
    %158 = arith.addf %155, %157 : vector<8x128xf32>
    %cst_41 = arith.constant 0.000000e+00 : f32
    %159 = vector.broadcast %cst_41 : f32 to vector<8x128xf32>
    %160 = arith.maximumf %158, %159 : vector<8x128xf32>
    %c13_42 = arith.constant 13 : index
    %161 = memref.load %arg3[%c13_42] : memref<20xf32, #tpu.memory_space<smem>>
    %162 = vector.broadcast %161 : f32 to vector<8x128xf32>
    %163 = arith.mulf %160, %162 : vector<8x128xf32>
    %164 = arith.addf %116, %163 : vector<8x128xf32>
    %c14 = arith.constant 14 : index
    %165 = memref.load %arg1[%c14] : memref<20xf32, #tpu.memory_space<smem>>
    %166 = vector.broadcast %165 : f32 to vector<8x128xf32>
    %167 = arith.mulf %0, %166 : vector<8x128xf32>
    %c14_43 = arith.constant 14 : index
    %168 = memref.load %arg2[%c14_43] : memref<20xf32, #tpu.memory_space<smem>>
    %169 = vector.broadcast %168 : f32 to vector<8x128xf32>
    %170 = arith.addf %167, %169 : vector<8x128xf32>
    %cst_44 = arith.constant 0.000000e+00 : f32
    %171 = vector.broadcast %cst_44 : f32 to vector<8x128xf32>
    %172 = arith.maximumf %170, %171 : vector<8x128xf32>
    %c14_45 = arith.constant 14 : index
    %173 = memref.load %arg3[%c14_45] : memref<20xf32, #tpu.memory_space<smem>>
    %174 = vector.broadcast %173 : f32 to vector<8x128xf32>
    %175 = arith.mulf %172, %174 : vector<8x128xf32>
    %176 = arith.addf %128, %175 : vector<8x128xf32>
    %c15 = arith.constant 15 : index
    %177 = memref.load %arg1[%c15] : memref<20xf32, #tpu.memory_space<smem>>
    %178 = vector.broadcast %177 : f32 to vector<8x128xf32>
    %179 = arith.mulf %0, %178 : vector<8x128xf32>
    %c15_46 = arith.constant 15 : index
    %180 = memref.load %arg2[%c15_46] : memref<20xf32, #tpu.memory_space<smem>>
    %181 = vector.broadcast %180 : f32 to vector<8x128xf32>
    %182 = arith.addf %179, %181 : vector<8x128xf32>
    %cst_47 = arith.constant 0.000000e+00 : f32
    %183 = vector.broadcast %cst_47 : f32 to vector<8x128xf32>
    %184 = arith.maximumf %182, %183 : vector<8x128xf32>
    %c15_48 = arith.constant 15 : index
    %185 = memref.load %arg3[%c15_48] : memref<20xf32, #tpu.memory_space<smem>>
    %186 = vector.broadcast %185 : f32 to vector<8x128xf32>
    %187 = arith.mulf %184, %186 : vector<8x128xf32>
    %188 = arith.addf %140, %187 : vector<8x128xf32>
    %c16 = arith.constant 16 : index
    %189 = memref.load %arg1[%c16] : memref<20xf32, #tpu.memory_space<smem>>
    %190 = vector.broadcast %189 : f32 to vector<8x128xf32>
    %191 = arith.mulf %0, %190 : vector<8x128xf32>
    %c16_49 = arith.constant 16 : index
    %192 = memref.load %arg2[%c16_49] : memref<20xf32, #tpu.memory_space<smem>>
    %193 = vector.broadcast %192 : f32 to vector<8x128xf32>
    %194 = arith.addf %191, %193 : vector<8x128xf32>
    %cst_50 = arith.constant 0.000000e+00 : f32
    %195 = vector.broadcast %cst_50 : f32 to vector<8x128xf32>
    %196 = arith.maximumf %194, %195 : vector<8x128xf32>
    %c16_51 = arith.constant 16 : index
    %197 = memref.load %arg3[%c16_51] : memref<20xf32, #tpu.memory_space<smem>>
    %198 = vector.broadcast %197 : f32 to vector<8x128xf32>
    %199 = arith.mulf %196, %198 : vector<8x128xf32>
    %200 = arith.addf %152, %199 : vector<8x128xf32>
    %c17 = arith.constant 17 : index
    %201 = memref.load %arg1[%c17] : memref<20xf32, #tpu.memory_space<smem>>
    %202 = vector.broadcast %201 : f32 to vector<8x128xf32>
    %203 = arith.mulf %0, %202 : vector<8x128xf32>
    %c17_52 = arith.constant 17 : index
    %204 = memref.load %arg2[%c17_52] : memref<20xf32, #tpu.memory_space<smem>>
    %205 = vector.broadcast %204 : f32 to vector<8x128xf32>
    %206 = arith.addf %203, %205 : vector<8x128xf32>
    %cst_53 = arith.constant 0.000000e+00 : f32
    %207 = vector.broadcast %cst_53 : f32 to vector<8x128xf32>
    %208 = arith.maximumf %206, %207 : vector<8x128xf32>
    %c17_54 = arith.constant 17 : index
    %209 = memref.load %arg3[%c17_54] : memref<20xf32, #tpu.memory_space<smem>>
    %210 = vector.broadcast %209 : f32 to vector<8x128xf32>
    %211 = arith.mulf %208, %210 : vector<8x128xf32>
    %212 = arith.addf %164, %211 : vector<8x128xf32>
    %c18 = arith.constant 18 : index
    %213 = memref.load %arg1[%c18] : memref<20xf32, #tpu.memory_space<smem>>
    %214 = vector.broadcast %213 : f32 to vector<8x128xf32>
    %215 = arith.mulf %0, %214 : vector<8x128xf32>
    %c18_55 = arith.constant 18 : index
    %216 = memref.load %arg2[%c18_55] : memref<20xf32, #tpu.memory_space<smem>>
    %217 = vector.broadcast %216 : f32 to vector<8x128xf32>
    %218 = arith.addf %215, %217 : vector<8x128xf32>
    %cst_56 = arith.constant 0.000000e+00 : f32
    %219 = vector.broadcast %cst_56 : f32 to vector<8x128xf32>
    %220 = arith.maximumf %218, %219 : vector<8x128xf32>
    %c18_57 = arith.constant 18 : index
    %221 = memref.load %arg3[%c18_57] : memref<20xf32, #tpu.memory_space<smem>>
    %222 = vector.broadcast %221 : f32 to vector<8x128xf32>
    %223 = arith.mulf %220, %222 : vector<8x128xf32>
    %224 = arith.addf %176, %223 : vector<8x128xf32>
    %c19 = arith.constant 19 : index
    %225 = memref.load %arg1[%c19] : memref<20xf32, #tpu.memory_space<smem>>
    %226 = vector.broadcast %225 : f32 to vector<8x128xf32>
    %227 = arith.mulf %0, %226 : vector<8x128xf32>
    %c19_58 = arith.constant 19 : index
    %228 = memref.load %arg2[%c19_58] : memref<20xf32, #tpu.memory_space<smem>>
    %229 = vector.broadcast %228 : f32 to vector<8x128xf32>
    %230 = arith.addf %227, %229 : vector<8x128xf32>
    %cst_59 = arith.constant 0.000000e+00 : f32
    %231 = vector.broadcast %cst_59 : f32 to vector<8x128xf32>
    %232 = arith.maximumf %230, %231 : vector<8x128xf32>
    %c19_60 = arith.constant 19 : index
    %233 = memref.load %arg3[%c19_60] : memref<20xf32, #tpu.memory_space<smem>>
    %234 = vector.broadcast %233 : f32 to vector<8x128xf32>
    %235 = arith.mulf %232, %234 : vector<8x128xf32>
    %236 = arith.addf %188, %235 : vector<8x128xf32>
    %237 = arith.addf %200, %212 : vector<8x128xf32>
    %238 = arith.addf %237, %224 : vector<8x128xf32>
    %239 = arith.addf %238, %236 : vector<8x128xf32>
    %c0_61 = arith.constant 0 : index
    %240 = memref.load %arg4[%c0_61] : memref<1xf32, #tpu.memory_space<smem>>
    %241 = vector.broadcast %240 : f32 to vector<8x128xf32>
    %242 = arith.addf %239, %241 : vector<8x128xf32>
    %c0_62 = arith.constant 0 : index
    %c0_63 = arith.constant 0 : index
    %243 = vector.load %arg6[%c0_62, %c0_63] : memref<8x128xf32, #tpu.memory_space<vmem>>, vector<8x128xf32>
    tpu.vector_store %arg6[%c0_62, %c0_63], %242 {strides = array<i32>} : memref<8x128xf32, #tpu.memory_space<vmem>>, vector<8x128xf32>,
    return
  }
  func.func @transform_0(%arg0: i32, %arg1: memref<20xf32, #tpu.memory_space<smem>>, %arg2: memref<20xf32, #tpu.memory_space<smem>>, %arg3: memref<20xf32, #tpu.memory_space<smem>>, %arg4: memref<1xf32, #tpu.memory_space<smem>>) -> (i32, i32) {
    %c0_i32 = arith.constant 0 : i32
    %c0_i32_0 = arith.constant 0 : i32
    return %arg0, %c0_i32 : i32, i32
  }
  func.func @transform_1(%arg0: i32, %arg1: memref<20xf32, #tpu.memory_space<smem>>, %arg2: memref<20xf32, #tpu.memory_space<smem>>, %arg3: memref<20xf32, #tpu.memory_space<smem>>, %arg4: memref<1xf32, #tpu.memory_space<smem>>) -> (i32, i32) {
    %c0_i32 = arith.constant 0 : i32
    %c0_i32_0 = arith.constant 0 : i32
    return %arg0, %c0_i32 : i32, i32
  }
}

</mosaic_0001>

<llo_original>
// kernel: tpu_custom_call.1
$region0: #{tpu_custom_call.1}
  #allocation0 [shape = 'u32[]', space=smem, size = 0x4, offset = 0x4, fixed_abs, tag = 'smem constant byte address 0x4 - core index']
  #allocation1 [shape = 'u32[144,128]{1,0:T(1,128)}', space=vmem, size = 0x12000, scoped, tag = 'internal scratch']
  #allocation2 [shape = 's32[1]{0}', space=sflag, size = 0x4, scoped, tag = 'scoped memory for tpu_custom_call.1']
  #allocation3 [shape = 'u8[512]{0}', space=smem, size = 0x200, scoped, tag = 'prefetched SMEM operand 0']
  #allocation4 [shape = 'u8[512]{0}', space=smem, size = 0x200, scoped, tag = 'prefetched SMEM operand 1']
  #allocation5 [shape = 'u8[512]{0}', space=smem, size = 0x200, scoped, tag = 'prefetched SMEM operand 2']
  #allocation6 [shape = 'f32[1]{0:T(128)S(6)}', space=smem, size = 0x200, scoped, tag = 'prefetched SMEM operand 3']
  %s0 = inlined_call_operand.vmem [shape: f32[20], index: 0, kind: input, shape index: {}]
  %s1 = inlined_call_operand.vmem [shape: f32[20], index: 1, kind: input, shape index: {}]
  %s2 = inlined_call_operand.vmem [shape: f32[20], index: 2, kind: input, shape index: {}]
  %s3 = inlined_call_operand.<no memory space> [shape: f32[1], index: 3, kind: input, shape index: {}]
  %s4 = inlined_call_operand.vmem [shape: f32[8,128], index: 4, kind: input, shape index: {}]
  %s5 = inlined_call_operand.hbm [shape: f32[8,128], index: 5, kind: output, shape index: {}]
  %s6 = sld [smem:[#allocation0]]
  $region14: #{tpu_custom_call.1} parent=0
    _
  %s8 = ssub.s32 1, %s6
  %s9 = scalar_select 0, %s8, %s6
  %s10 = sshll.u32 %s0, 4
  %s11 = int_to_ptr.vmem [resolvable:$true] %s10
  %13 = dma.vmem_to_smem %s11, 16, [#allocation3], [#allocation2]
  %s14 = sshll.u32 %s1, 4
  %s15 = int_to_ptr.vmem [resolvable:$true] %s14
  %17 = dma.vmem_to_smem %s15, 16, [#allocation4], [#allocation2]
  %s18 = sshll.u32 %s2, 4
  %s19 = int_to_ptr.vmem [resolvable:$true] %s18
  %21 = dma.vmem_to_smem %s19, 16, [#allocation5], [#allocation2]
  %22 = sst [smem:[#allocation6]] %s3
  %23 = dma.done [#allocation2], 48
  %24 = sfence
  $region1: #{tpu_custom_call.1} parent=0
    #allocation7 [shape = 'u8[4096]{0}', space=vmem, size = 0x1000, scoped, tag = 'output window, operand 0, single buffered']
    #allocation8 [shape = 's32[1]{0}', space=sflag, size = 0x4, scoped, tag = 'scoped memory for tpu_custom_call.1']
    %25 = vsyncpa [#allocation8], 0
    // Predicated region
    $region2: #{tpu_custom_call.1} parent=1 // pred_check
      _
    $region3: #{tpu_custom_call.1} parent=1 // pred_check_branch
      %27 = sbr.rel (0) target = $region5
    $region4: #{tpu_custom_call.1} parent=1 // pred_region
      _
    $region5: #{tpu_custom_call.1} parent=1 // pred_fallthru
      _
    %v28 = vld [vmem:[%s4] sm:$0xff]
    %s29 = sld [smem:[#allocation3]]
    %v30 = vstv %s29
    %v31 = vmul.f32 %v28, %v30
    %s32 = sld [smem:[#allocation4]]
    %v33 = vstv %s32
    %v34 = vadd.f32 %v31, %v33
    %v35 = vmax.f32 %v34, 0.0
    %s36 = sld [smem:[#allocation5]]
    %v37 = vstv %s36
    %v38 = vmul.f32 %v35, %v37
    %s39 = sld [smem:[#allocation3 + $0x1]]
    %v40 = vstv %s39
    %v41 = vmul.f32 %v28, %v40
    %s42 = sld [smem:[#allocation4 + $0x1]]
    %v43 = vstv %s42
    %v44 = vadd.f32 %v41, %v43
    %v45 = vmax.f32 %v44, 0.0
    %s46 = sld [smem:[#allocation5 + $0x1]]
    %v47 = vstv %s46
    %v48 = vmul.f32 %v45, %v47
    %s49 = sld [smem:[#allocation3 + $0x2]]
    %v50 = vstv %s49
    %v51 = vmul.f32 %v28, %v50
    %s52 = sld [smem:[#allocation4 + $0x2]]
    %v53 = vstv %s52
    %v54 = vadd.f32 %v51, %v53
    %v55 = vmax.f32 %v54, 0.0
    %s56 = sld [smem:[#allocation5 + $0x2]]
    %v57 = vstv %s56
    %v58 = vmul.f32 %v55, %v57
    %s59 = sld [smem:[#allocation3 + $0x3]]
    %v60 = vstv %s59
    %v61 = vmul.f32 %v28, %v60
    %s62 = sld [smem:[#allocation4 + $0x3]]
    %v63 = vstv %s62
    %v64 = vadd.f32 %v61, %v63
    %v65 = vmax.f32 %v64, 0.0
    %s66 = sld [smem:[#allocation5 + $0x3]]
    %v67 = vstv %s66
    %v68 = vmul.f32 %v65, %v67
    %s69 = sld [smem:[#allocation3 + $0x4]]
    %v70 = vstv %s69
    %v71 = vmul.f32 %v28, %v70
    %s72 = sld [smem:[#allocation4 + $0x4]]
    %v73 = vstv %s72
    %v74 = vadd.f32 %v71, %v73
    %v75 = vmax.f32 %v74, 0.0
    %s76 = sld [smem:[#allocation5 + $0x4]]
    %v77 = vstv %s76
    %v78 = vmul.f32 %v75, %v77
    %v79 = vadd.f32 %v38, %v78
    %s80 = sld [smem:[#allocation3 + $0x5]]
    %v81 = vstv %s80
    %v82 = vmul.f32 %v28, %v81
    %s83 = sld [smem:[#allocation4 + $0x5]]
    %v84 = vstv %s83
    %v85 = vadd.f32 %v82, %v84
    %v86 = vmax.f32 %v85, 0.0
    %s87 = sld [smem:[#allocation5 + $0x5]]
    %v88 = vstv %s87
    %v89 = vmul.f32 %v86, %v88
    %v90 = vadd.f32 %v48, %v89
    %s91 = sld [smem:[#allocation3 + $0x6]]
    %v92 = vstv %s91
    %v93 = vmul.f32 %v28, %v92
    %s94 = sld [smem:[#allocation4 + $0x6]]
    %v95 = vstv %s94
    %v96 = vadd.f32 %v93, %v95
    %v97 = vmax.f32 %v96, 0.0
    %s98 = sld [smem:[#allocation5 + $0x6]]
    %v99 = vstv %s98
    %v100 = vmul.f32 %v97, %v99
    %v101 = vadd.f32 %v58, %v100
    %s102 = sld [smem:[#allocation3 + $0x7]]
    %v103 = vstv %s102
    %v104 = vmul.f32 %v28, %v103
    %s105 = sld [smem:[#allocation4 + $0x7]]
    %v106 = vstv %s105
    %v107 = vadd.f32 %v104, %v106
    %v108 = vmax.f32 %v107, 0.0
    %s109 = sld [smem:[#allocation5 + $0x7]]
    %v110 = vstv %s109
    %v111 = vmul.f32 %v108, %v110
    %v112 = vadd.f32 %v68, %v111
    %s113 = sld [smem:[#allocation3 + $0x8]]
    %v114 = vstv %s113
    %v115 = vmul.f32 %v28, %v114
    %s116 = sld [smem:[#allocation4 + $0x8]]
    %v117 = vstv %s116
    %v118 = vadd.f32 %v115, %v117
    %v119 = vmax.f32 %v118, 0.0
    %s120 = sld [smem:[#allocation5 + $0x8]]
    %v121 = vstv %s120
    %v122 = vmul.f32 %v119, %v121
    %v123 = vadd.f32 %v79, %v122
    %s124 = sld [smem:[#allocation3 + $0x9]]
    %v125 = vstv %s124
    %v126 = vmul.f32 %v28, %v125
    %s127 = sld [smem:[#allocation4 + $0x9]]
    %v128 = vstv %s127
    %v129 = vadd.f32 %v126, %v128
    %v130 = vmax.f32 %v129, 0.0
    %s131 = sld [smem:[#allocation5 + $0x9]]
    %v132 = vstv %s131
    %v133 = vmul.f32 %v130, %v132
    %v134 = vadd.f32 %v90, %v133
    %s135 = sld [smem:[#allocation3 + $0xa]]
    %v136 = vstv %s135
    %v137 = vmul.f32 %v28, %v136
    %s138 = sld [smem:[#allocation4 + $0xa]]
    %v139 = vstv %s138
    %v140 = vadd.f32 %v137, %v139
    %v141 = vmax.f32 %v140, 0.0
    %s142 = sld [smem:[#allocation5 + $0xa]]
    %v143 = vstv %s142
    %v144 = vmul.f32 %v141, %v143
    %v145 = vadd.f32 %v101, %v144
    %s146 = sld [smem:[#allocation3 + $0xb]]
    %v147 = vstv %s146
    %v148 = vmul.f32 %v28, %v147
    %s149 = sld [smem:[#allocation4 + $0xb]]
    %v150 = vstv %s149
    %v151 = vadd.f32 %v148, %v150
    %v152 = vmax.f32 %v151, 0.0
    %s153 = sld [smem:[#allocation5 + $0xb]]
    %v154 = vstv %s153
    %v155 = vmul.f32 %v152, %v154
    %v156 = vadd.f32 %v112, %v155
    %s157 = sld [smem:[#allocation3 + $0xc]]
    %v158 = vstv %s157
    %v159 = vmul.f32 %v28, %v158
    %s160 = sld [smem:[#allocation4 + $0xc]]
    %v161 = vstv %s160
    %v162 = vadd.f32 %v159, %v161
    %v163 = vmax.f32 %v162, 0.0
    %s164 = sld [smem:[#allocation5 + $0xc]]
    %v165 = vstv %s164
    %v166 = vmul.f32 %v163, %v165
    %v167 = vadd.f32 %v123, %v166
    %s168 = sld [smem:[#allocation3 + $0xd]]
    %v169 = vstv %s168
    %v170 = vmul.f32 %v28, %v169
    %s171 = sld [smem:[#allocation4 + $0xd]]
    %v172 = vstv %s171
    %v173 = vadd.f32 %v170, %v172
    %v174 = vmax.f32 %v173, 0.0
    %s175 = sld [smem:[#allocation5 + $0xd]]
    %v176 = vstv %s175
    %v177 = vmul.f32 %v174, %v176
    %v178 = vadd.f32 %v134, %v177
    %s179 = sld [smem:[#allocation3 + $0xe]]
    %v180 = vstv %s179
    %v181 = vmul.f32 %v28, %v180
    %s182 = sld [smem:[#allocation4 + $0xe]]
    %v183 = vstv %s182
    %v184 = vadd.f32 %v181, %v183
    %v185 = vmax.f32 %v184, 0.0
    %s186 = sld [smem:[#allocation5 + $0xe]]
    %v187 = vstv %s186
    %v188 = vmul.f32 %v185, %v187
    %v189 = vadd.f32 %v145, %v188
    %s190 = sld [smem:[#allocation3 + $0xf]]
    %v191 = vstv %s190
    %v192 = vmul.f32 %v28, %v191
    %s193 = sld [smem:[#allocation4 + $0xf]]
    %v194 = vstv %s193
    %v195 = vadd.f32 %v192, %v194
    %v196 = vmax.f32 %v195, 0.0
    %s197 = sld [smem:[#allocation5 + $0xf]]
    %v198 = vstv %s197
    %v199 = vmul.f32 %v196, %v198
    %v200 = vadd.f32 %v156, %v199
    %s201 = sld [smem:[#allocation3 + $0x10]]
    %v202 = vstv %s201
    %v203 = vmul.f32 %v28, %v202
    %s204 = sld [smem:[#allocation4 + $0x10]]
    %v205 = vstv %s204
    %v206 = vadd.f32 %v203, %v205
    %v207 = vmax.f32 %v206, 0.0
    %s208 = sld [smem:[#allocation5 + $0x10]]
    %v209 = vstv %s208
    %v210 = vmul.f32 %v207, %v209
    %v211 = vadd.f32 %v167, %v210
    %s212 = sld [smem:[#allocation3 + $0x11]]
    %v213 = vstv %s212
    %v214 = vmul.f32 %v28, %v213
    %s215 = sld [smem:[#allocation4 + $0x11]]
    %v216 = vstv %s215
    %v217 = vadd.f32 %v214, %v216
    %v218 = vmax.f32 %v217, 0.0
    %s219 = sld [smem:[#allocation5 + $0x11]]
    %v220 = vstv %s219
    %v221 = vmul.f32 %v218, %v220
    %v222 = vadd.f32 %v178, %v221
    %s223 = sld [smem:[#allocation3 + $0x12]]
    %v224 = vstv %s223
    %v225 = vmul.f32 %v28, %v224
    %s226 = sld [smem:[#allocation4 + $0x12]]
    %v227 = vstv %s226
    %v228 = vadd.f32 %v225, %v227
    %v229 = vmax.f32 %v228, 0.0
    %s230 = sld [smem:[#allocation5 + $0x12]]
    %v231 = vstv %s230
    %v232 = vmul.f32 %v229, %v231
    %v233 = vadd.f32 %v189, %v232
    %s234 = sld [smem:[#allocation3 + $0x13]]
    %v235 = vstv %s234
    %v236 = vmul.f32 %v28, %v235
    %s237 = sld [smem:[#allocation4 + $0x13]]
    %v238 = vstv %s237
    %v239 = vadd.f32 %v236, %v238
    %v240 = vmax.f32 %v239, 0.0
    %s241 = sld [smem:[#allocation5 + $0x13]]
    %v242 = vstv %s241
    %v243 = vmul.f32 %v240, %v242
    %v244 = vadd.f32 %v200, %v243
    %v245 = vadd.f32 %v211, %v222
    %v246 = vadd.f32 %v245, %v233
    %v247 = vadd.f32 %v246, %v244
    %s248 = sld [smem:[#allocation6]]
    %v249 = vstv %s248
    %v250 = vadd.f32 %v247, %v249
    %251 = vst [vmem:[#allocation7] sm:$0xff] %v250
    // Predicated region
    $region6: #{tpu_custom_call.1} parent=1 // pred_check
      _
    $region7: #{tpu_custom_call.1} parent=1 // pred_check_branch
      %253 = sbr.rel (0) target = $region9
    $region8: #{tpu_custom_call.1} parent=1 // pred_region
      %s255 = ssub.s32 128, 128
      %256 = vsyncadd [#allocation8], %s255
      %s258 = sshll.u32 [#allocation7], 4
      %s259 = int_to_ptr.vmem [resolvable:$true] %s258
      %261 = dma.vmem_to_hbm [thread:$0]  %s259, 128, %s5, [#allocation8]
    $region9: #{tpu_custom_call.1} parent=1 // pred_fallthru
      _
    // Predicated region
    $region10: #{tpu_custom_call.1} parent=1 // pred_check
      _
    $region11: #{tpu_custom_call.1} parent=1 // pred_check_branch
      %263 = sbr.rel (0) target = $region13
    $region12: #{tpu_custom_call.1} parent=1 // pred_region
      %264 = dma.done [#allocation8], 128
    $region13: #{tpu_custom_call.1} parent=1 // pred_fallthru
      _
    %265 = vsyncpa [#allocation8], 1

</llo_original>
